<compile_context>
chip_gen: v6e
topology: v6e:2x2x1
jax: 0.10.0
libtpu: 0.0.40
codegen_flags: <defaults>
</compile_context>

<pallas_src>
import jax
import jax.numpy as jnp
from jax.experimental import pallas as pl
from jax.experimental.pallas import tpu as pltpu


# v7x: shard the batch grid axis across the 2 TensorCores. Harmless on
# single-TC v5e/v6e. Fallback keeps older jax versions working.
_BATCH_DIM_SEMANTICS = getattr(pltpu, "CORE_PARALLEL", "parallel")

# Large negative logit used to pad b3's extra (lane-fill) columns so that
# exp(logit_pad - m) == 0 and the padded columns never contribute to softmax.
_NEG_LOGIT = -1.0e30


def actor_kernel(x_ref, w1_ref, b1_ref, w2_ref, b2_ref, w3_ref, b3_ref, probs_ref):
    """Fused MLP forward: Linear->ReLU->Linear->ReLU->Linear->softmax."""
    # In-kernel f32 -> bf16 cast of the activations (free VPU filler; avoids a
    # separate HBM-read/write cast op in the wrapper).
    x = x_ref[...].astype(w1_ref.dtype)

    # Layer 1: Linear + ReLU (bf16 MXU matmul, f32 accumulation)
    h1 = jnp.dot(x, w1_ref[...], preferred_element_type=jnp.float32)
    h1 = jnp.maximum(h1 + b1_ref[...], 0.0)

    # Layer 2: Linear + ReLU
    h2 = jnp.dot(h1.astype(w2_ref.dtype), w2_ref[...],
                 preferred_element_type=jnp.float32)
    h2 = jnp.maximum(h2 + b2_ref[...], 0.0)

    # Layer 3: Linear (logits). w3/b3 are lane-padded to 128 columns; padded
    # bias slots hold a huge negative value so they vanish under softmax.
    logits = jnp.dot(h2.astype(w3_ref.dtype), w3_ref[...],
                     preferred_element_type=jnp.float32)
    logits = logits + b3_ref[...]

    # Numerically-stable softmax over a full 128-lane vreg (lane-dense XLU
    # reductions). Exact division: probabilities must sum to 1.
    m = jnp.max(logits, axis=-1, keepdims=True)
    e = jnp.exp(logits - m)
    denom = jnp.sum(e, axis=-1, keepdims=True)
    probs = e / denom

    # Store only the real action columns (padded columns are exactly 0).
    a = probs_ref.shape[-1]
    probs_ref[...] = probs[:, :a].astype(probs_ref.dtype)


def actor_forward(x, params, action_size, *, batch_tile=2048):
    """Run the Actor forward pass. Returns softmax probabilities (B, action_size)."""
    w1, b1, w2, b2, w3, b3 = params
    B, S = x.shape
    H1 = w1.shape[1]
    H2 = w2.shape[1]
    Ap = w3.shape[1]  # lane-padded action width (multiple of 128)

    if B <= batch_tile:
        # Small-batch path: no grid -> no pipeline double-buffering, every
        # operand is a single VMEM-resident block (pure launch/DMA latency).
        return pl.pallas_call(
            actor_kernel,
            out_shape=jax.ShapeDtypeStruct((B, action_size), jnp.float32),
            in_specs=[pl.BlockSpec(memory_space=pltpu.MemorySpace.VMEM)] * 7,
            out_specs=pl.BlockSpec(memory_space=pltpu.MemorySpace.VMEM),
        )(x, w1, b1, w2, b2, w3, b3)

    # Large-batch path: tile the batch axis with a big tile to amortize the
    # ~0.35us/step pipeline overhead. Weights/biases (~0.2 MiB) use
    # index_map (0, 0) so they are DMA'd once and stay VMEM-resident. The
    # partial last block (B not a multiple of tb) reads undefined rows but
    # only produces masked writes — no wrapper pad/slice needed.
    tb = batch_tile
    grid = (pl.cdiv(B, tb),)
    return pl.pallas_call(
        actor_kernel,
        out_shape=jax.ShapeDtypeStruct((B, action_size), jnp.float32),
        grid=grid,
        in_specs=[
            pl.BlockSpec((tb, S), lambda i: (i, 0)),
            pl.BlockSpec((S, H1), lambda i: (0, 0)),
            pl.BlockSpec((1, H1), lambda i: (0, 0)),
            pl.BlockSpec((H1, H2), lambda i: (0, 0)),
            pl.BlockSpec((1, H2), lambda i: (0, 0)),
            pl.BlockSpec((H2, Ap), lambda i: (0, 0)),
            pl.BlockSpec((1, Ap), lambda i: (0, 0)),
        ],
        out_specs=pl.BlockSpec((tb, action_size), lambda i: (i, 0)),
        compiler_params=pltpu.CompilerParams(
            dimension_semantics=(_BATCH_DIM_SEMANTICS,),
            vmem_limit_bytes=32 * 1024 * 1024,
        ),
    )(x, w1, b1, w2, b2, w3, b3)


def init_params(key, state_size, action_size):
    """Deterministic init mimicking PyTorch nn.Linear default (U[-1/sqrt(fan_in), 1/sqrt(fan_in)])."""
    dims = [(state_size, 128), (128, 256), (256, action_size)]
    params = []
    for fan_in, fan_out in dims:
        key, kw, kb = jax.random.split(key, 3)
        bound = 1.0 / jnp.sqrt(fan_in)
        w = jax.random.uniform(kw, (fan_in, fan_out), jnp.float32, -bound, bound)
        b = jax.random.uniform(kb, (1, fan_out), jnp.float32, -bound, bound)
        params.extend([w, b])
    return tuple(params)


def prepare_params(params, lane=128):
    """One-time host prep:
      * weights -> bf16 (halves HBM bytes, bf16 MXU path); biases stay f32.
      * w3/b3 lane-padded to a multiple of 128 columns (zeros / -1e30 logits)
        so the in-kernel softmax runs over a full, lane-dense vreg.
    """
    w1, b1, w2, b2, w3, b3 = params
    a = w3.shape[1]
    ap = ((a + lane - 1) // lane) * lane
    pad = ap - a
    w3p = jnp.pad(w3, ((0, 0), (0, pad)))
    b3p = jnp.pad(b3, ((0, 0), (0, pad)), constant_values=_NEG_LOGIT)
    return (w1.astype(jnp.bfloat16), b1.astype(jnp.float32),
            w2.astype(jnp.bfloat16), b2.astype(jnp.float32),
            w3p.astype(jnp.bfloat16), b3p.astype(jnp.float32))


def actor_reference(x, prepared_params, action_size):
    """Pure-JAX reference with the same bf16 casting / f32 accumulation as the kernel."""
    w1, b1, w2, b2, w3, b3 = prepared_params
    xb = x.astype(jnp.bfloat16)
    h1 = jnp.maximum(jnp.dot(xb, w1, preferred_element_type=jnp.float32) + b1, 0.0)
    h2 = jnp.maximum(
        jnp.dot(h1.astype(jnp.bfloat16), w2, preferred_element_type=jnp.float32) + b2, 0.0)
    logits = jnp.dot(h2.astype(jnp.bfloat16), w3, preferred_element_type=jnp.float32) + b3
    return jax.nn.softmax(logits, axis=-1)[:, :action_size]


if __name__ == "__main__":
    # CartPole-v0 as in the reference script: state_size = 4, action_size = 2.
    state_size = 4
    action_size = 2

    key = jax.random.PRNGKey(0)
    key, kx1, kx2 = jax.random.split(key, 3)
    params = prepare_params(init_params(key, state_size, action_size))

    # --- small batch: grid-free, fully VMEM-resident path ---------------------
    batch = 8
    x_small = jax.random.normal(kx1, (batch, state_size), jnp.float32)
    probs = jax.block_until_ready(actor_forward(x_small, params, action_size))
    ref = actor_reference(x_small, params, action_size)
    assert probs.shape == (batch, action_size)
    assert jnp.allclose(probs, ref, atol=2e-3, rtol=2e-3), "small-batch mismatch vs. reference"
    assert jnp.allclose(jnp.sum(probs, axis=-1), 1.0, atol=1e-4), "probs do not sum to 1"

    # --- larger batch: batch-tiled path (resident weights, cdiv grid with a
    # partial last block, CORE_PARALLEL batch axis). Small tile here only to
    # exercise the tiled path at test shapes; production default is 2048. ----
    big_batch = 300  # deliberately not a multiple of the tile -> exercises masked last block
    x_big = jax.random.normal(kx2, (big_batch, state_size), jnp.float32)
    probs_big = jax.block_until_ready(
        actor_forward(x_big, params, action_size, batch_tile=128))
    ref_big = actor_reference(x_big, params, action_size)
    assert probs_big.shape == (big_batch, action_size)
    assert jnp.allclose(probs_big, ref_big, atol=2e-3, rtol=2e-3), "tiled-batch mismatch vs. reference"
    assert jnp.allclose(jnp.sum(probs_big, axis=-1), 1.0, atol=1e-4), "tiled probs do not sum to 1"

    print("KERNEL_OK")
</pallas_src>

<mosaic_0001>
module attributes {stable_mosaic.version = 11 : i64} {
  func.func @actor_kernel(%arg0: memref<8x4xf32, #tpu.memory_space<vmem>>, %arg1: memref<4x128xbf16, #tpu.memory_space<vmem>>, %arg2: memref<1x128xf32, #tpu.memory_space<vmem>>, %arg3: memref<128x256xbf16, #tpu.memory_space<vmem>>, %arg4: memref<1x256xf32, #tpu.memory_space<vmem>>, %arg5: memref<256x128xbf16, #tpu.memory_space<vmem>>, %arg6: memref<1x128xf32, #tpu.memory_space<vmem>>, %arg7: memref<8x2xf32, #tpu.memory_space<vmem>>) attributes {dimension_semantics = [], scalar_prefetch = 0 : i64, scratch_operands = 0 : i64, tpu.core_type = #tpu.core_type<tc>} {
    %c0 = arith.constant 0 : index
    %c0_0 = arith.constant 0 : index
    %0 = vector.load %arg0[%c0, %c0_0] : memref<8x4xf32, #tpu.memory_space<vmem>>, vector<8x4xf32>
    %1 = arith.truncf %0 : vector<8x4xf32> to vector<8x4xbf16>
    %c0_1 = arith.constant 0 : index
    %c0_2 = arith.constant 0 : index
    %2 = vector.load %arg1[%c0_1, %c0_2] : memref<4x128xbf16, #tpu.memory_space<vmem>>, vector<4x128xbf16>
    %cst = arith.constant dense<0.000000e+00> : vector<8x128xf32>
    %3 = tpu.matmul %1, %2, %cst {dimension_numbers = #tpu.dot_dimension_numbers<[1], [0], [0], [1], [0, 0, 1, 1], [], []>} : vector<8x4xbf16>, vector<4x128xbf16>, vector<8x128xf32> -> vector<8x128xf32>
    %c0_3 = arith.constant 0 : index
    %c0_4 = arith.constant 0 : index
    %4 = vector.load %arg2[%c0_3, %c0_4] : memref<1x128xf32, #tpu.memory_space<vmem>>, vector<1x128xf32>
    %5 = vector.broadcast %4 : vector<1x128xf32> to vector<8x128xf32>
    %6 = arith.addf %3, %5 : vector<8x128xf32>
    %cst_5 = arith.constant 0.000000e+00 : f32
    %7 = vector.broadcast %cst_5 : f32 to vector<8x128xf32>
    %8 = arith.maximumf %6, %7 : vector<8x128xf32>
    %9 = arith.truncf %8 : vector<8x128xf32> to vector<8x128xbf16>
    %c0_6 = arith.constant 0 : index
    %c0_7 = arith.constant 0 : index
    %10 = vector.load %arg3[%c0_6, %c0_7] : memref<128x256xbf16, #tpu.memory_space<vmem>>, vector<128x256xbf16>
    %cst_8 = arith.constant dense<0.000000e+00> : vector<8x256xf32>
    %11 = tpu.matmul %9, %10, %cst_8 {dimension_numbers = #tpu.dot_dimension_numbers<[1], [0], [0], [1], [0, 0, 1, 1], [], []>} : vector<8x128xbf16>, vector<128x256xbf16>, vector<8x256xf32> -> vector<8x256xf32>
    %c0_9 = arith.constant 0 : index
    %c0_10 = arith.constant 0 : index
    %12 = vector.load %arg4[%c0_9, %c0_10] : memref<1x256xf32, #tpu.memory_space<vmem>>, vector<1x256xf32>
    %13 = vector.broadcast %12 : vector<1x256xf32> to vector<8x256xf32>
    %14 = arith.addf %11, %13 : vector<8x256xf32>
    %cst_11 = arith.constant 0.000000e+00 : f32
    %15 = vector.broadcast %cst_11 : f32 to vector<8x256xf32>
    %16 = arith.maximumf %14, %15 : vector<8x256xf32>
    %17 = arith.truncf %16 : vector<8x256xf32> to vector<8x256xbf16>
    %c0_12 = arith.constant 0 : index
    %c0_13 = arith.constant 0 : index
    %18 = vector.load %arg5[%c0_12, %c0_13] : memref<256x128xbf16, #tpu.memory_space<vmem>>, vector<256x128xbf16>
    %cst_14 = arith.constant dense<0.000000e+00> : vector<8x128xf32>
    %19 = tpu.matmul %17, %18, %cst_14 {dimension_numbers = #tpu.dot_dimension_numbers<[1], [0], [0], [1], [0, 0, 1, 1], [], []>} : vector<8x256xbf16>, vector<256x128xbf16>, vector<8x128xf32> -> vector<8x128xf32>
    %c0_15 = arith.constant 0 : index
    %c0_16 = arith.constant 0 : index
    %20 = vector.load %arg6[%c0_15, %c0_16] : memref<1x128xf32, #tpu.memory_space<vmem>>, vector<1x128xf32>
    %21 = vector.broadcast %20 : vector<1x128xf32> to vector<8x128xf32>
    %22 = arith.addf %19, %21 : vector<8x128xf32>
    %cst_17 = arith.constant dense<0xFF800000> : vector<8xf32>
    %23 = vector.multi_reduction <maximumf>, %22, %cst_17 [1] : vector<8x128xf32> to vector<8xf32>
    %24 = vector.shape_cast %23 : vector<8xf32> to vector<8x1xf32>
    %25 = vector.broadcast %24 : vector<8x1xf32> to vector<8x128xf32>
    %26 = arith.subf %22, %25 : vector<8x128xf32>
    %27 = math.exp %26 : vector<8x128xf32>
    %cst_18 = arith.constant dense<0.000000e+00> : vector<8xf32>
    %28 = vector.multi_reduction <add>, %27, %cst_18 [1] : vector<8x128xf32> to vector<8xf32>
    %29 = vector.shape_cast %28 : vector<8xf32> to vector<8x1xf32>
    %30 = vector.broadcast %29 : vector<8x1xf32> to vector<8x128xf32>
    %31 = arith.divf %27, %30 : vector<8x128xf32>
    %32 = vector.extract_strided_slice %31 {offsets = [0, 0], sizes = [8, 2], strides = [1, 1]} : vector<8x128xf32> to vector<8x2xf32>
    %c0_19 = arith.constant 0 : index
    %c0_20 = arith.constant 0 : index
    %33 = vector.load %arg7[%c0_19, %c0_20] : memref<8x2xf32, #tpu.memory_space<vmem>>, vector<8x2xf32>
    tpu.vector_store %arg7[%c0_19, %c0_20], %32 {strides = array<i32>} : memref<8x2xf32, #tpu.memory_space<vmem>>, vector<8x2xf32>,
    return
  }
}

</mosaic_0001>

<llo_original>
// kernel: tpu_custom_call.1
$region0: #{tpu_custom_call.1}
  #allocation0 [shape = 'u32[]', space=smem, size = 0x4, offset = 0x4, fixed_abs, tag = 'smem constant byte address 0x4 - core index']
  #allocation1 [shape = 'u32[144,128]{1,0:T(1,128)}', space=vmem, size = 0x12000, scoped, tag = 'internal scratch']
  %s0 = inlined_call_operand.vmem [shape: f32[8,4], index: 0, kind: input, shape index: {}]
  %s1 = inlined_call_operand.vmem [shape: bf16[4,128], index: 1, kind: input, shape index: {}]
  %s2 = inlined_call_operand.vmem [shape: f32[1,128], index: 2, kind: input, shape index: {}]
  %s3 = inlined_call_operand.hbm [shape: bf16[128,256], index: 3, kind: input, shape index: {}]
  %s4 = inlined_call_operand.vmem [shape: f32[1,256], index: 4, kind: input, shape index: {}]
  %s5 = inlined_call_operand.hbm [shape: bf16[256,128], index: 5, kind: input, shape index: {}]
  %s6 = inlined_call_operand.vmem [shape: f32[1,128], index: 6, kind: input, shape index: {}]
  %s7 = inlined_call_operand.vmem [shape: f32[8,2], index: 7, kind: output, shape index: {}]
  %s8 = sld [smem:[#allocation0]]
  $region46: #{tpu_custom_call.1} parent=0
    _
  %s10 = ssub.s32 1, %s8
  %s11 = scalar_select 0, %s10, %s8
  $region1: #{tpu_custom_call.1} parent=0
    #allocation2 [shape = 'u8[65536]{0}', space=vmem, size = 0x10000, scoped, tag = 'input window, operand 3, single buffered']
    #allocation3 [shape = 's32[1]{0}', space=sflag, size = 0x4, scoped, tag = 'scoped memory for tpu_custom_call.1']
    #allocation4 [shape = 'u8[65536]{0}', space=vmem, size = 0x10000, scoped, tag = 'input window, operand 5, single buffered']
    #allocation5 [shape = 's32[1]{0}', space=sflag, size = 0x4, scoped, tag = 'scoped memory for tpu_custom_call.1']
    %12 = vsyncpa [#allocation3], 0
    %13 = vsyncpa [#allocation5], 0
    // Predicated region
    $region2: #{tpu_custom_call.1} parent=1 // pred_check
      _
    $region3: #{tpu_custom_call.1} parent=1 // pred_check_branch
      %15 = sbr.rel (0) target = $region5
    $region4: #{tpu_custom_call.1} parent=1 // pred_region
      _
    $region5: #{tpu_custom_call.1} parent=1 // pred_fallthru
      _
    // Predicated region
    $region6: #{tpu_custom_call.1} parent=1 // pred_check
      _
    $region7: #{tpu_custom_call.1} parent=1 // pred_check_branch
      %17 = sbr.rel (0) target = $region9
    $region8: #{tpu_custom_call.1} parent=1 // pred_region
      _
    $region9: #{tpu_custom_call.1} parent=1 // pred_fallthru
      _
    // Predicated region
    $region10: #{tpu_custom_call.1} parent=1 // pred_check
      _
    $region11: #{tpu_custom_call.1} parent=1 // pred_check_branch
      %19 = sbr.rel (0) target = $region13
    $region12: #{tpu_custom_call.1} parent=1 // pred_region
      _
    $region13: #{tpu_custom_call.1} parent=1 // pred_fallthru
      _
    // Predicated region
    $region14: #{tpu_custom_call.1} parent=1 // pred_check
      _
    $region15: #{tpu_custom_call.1} parent=1 // pred_check_branch
      %21 = sbr.rel (0) target = $region17
    $region16: #{tpu_custom_call.1} parent=1 // pred_region
      %s23 = ssub.s32 2048, 2048
      %24 = vsyncadd [#allocation3], %s23
      %s25 = sshll.u32 [#allocation2], 4
      %s26 = int_to_ptr.vmem [resolvable:$true] %s25
      %31 = dma.hbm_to_vmem [thread:$0]  %s3, 2048, %s26, [#allocation3], 128, 128, 8
    $region17: #{tpu_custom_call.1} parent=1 // pred_fallthru
      _
    // Predicated region
    $region18: #{tpu_custom_call.1} parent=1 // pred_check
      _
    $region19: #{tpu_custom_call.1} parent=1 // pred_check_branch
      %33 = sbr.rel (0) target = $region21
    $region20: #{tpu_custom_call.1} parent=1 // pred_region
      _
    $region21: #{tpu_custom_call.1} parent=1 // pred_fallthru
      _
    // Predicated region
    $region22: #{tpu_custom_call.1} parent=1 // pred_check
      _
    $region23: #{tpu_custom_call.1} parent=1 // pred_check_branch
      %35 = sbr.rel (0) target = $region25
    $region24: #{tpu_custom_call.1} parent=1 // pred_region
      %s37 = ssub.s32 2048, 2048
      %38 = vsyncadd [#allocation5], %s37
      %s39 = sshll.u32 [#allocation4], 4
      %s40 = int_to_ptr.vmem [resolvable:$true] %s39
      %45 = dma.hbm_to_vmem [thread:$0]  %s5, 2048, %s40, [#allocation5], 64, 64, 4
    $region25: #{tpu_custom_call.1} parent=1 // pred_fallthru
      _
    // Predicated region
    $region26: #{tpu_custom_call.1} parent=1 // pred_check
      _
    $region27: #{tpu_custom_call.1} parent=1 // pred_check_branch
      %47 = sbr.rel (0) target = $region29
    $region28: #{tpu_custom_call.1} parent=1 // pred_region
      _
    $region29: #{tpu_custom_call.1} parent=1 // pred_fallthru
      _
    // Predicated region
    $region30: #{tpu_custom_call.1} parent=1 // pred_check
      _
    $region31: #{tpu_custom_call.1} parent=1 // pred_check_branch
      %49 = sbr.rel (0) target = $region33
    $region32: #{tpu_custom_call.1} parent=1 // pred_region
      %50 = dma.done [#allocation3], 2048
    $region33: #{tpu_custom_call.1} parent=1 // pred_fallthru
      _
    // Predicated region
    $region34: #{tpu_custom_call.1} parent=1 // pred_check
      _
    $region35: #{tpu_custom_call.1} parent=1 // pred_check_branch
      %52 = sbr.rel (0) target = $region37
    $region36: #{tpu_custom_call.1} parent=1 // pred_region
      %53 = dma.done [#allocation5], 2048
    $region37: #{tpu_custom_call.1} parent=1 // pred_fallthru
      _
    %v55 = vld [vmem:[%s0] sm:$0xff]
    %v56 = vpack.c.bf16 %v55, %v55
    %v57 = vld [vmem:[%s1] sm:$0x3]
    %v58 = vld [vmem:[%s2] sm:$0x1]
    %v60 = vlaneseq
    %v61 = vshrl.u32 %v60, 7
    %v62 = vsub.s32 0, %v61
    %v63 = vrot.slane %v58, %v62
    %vm65 = vcmask 31744
    %v67 = vsel %vm65, %v56, 0
    %vm69 = vcmask 1041408
    %v71 = vsel %vm69, %v57, 0
    %73 = vmatprep.subr.bf16.mxu0 0
    %74 = vmatpush1.bf16.msra.mxu0 0
    %75 = vmatprep.subr.bf16.mxu0 0
    %76 = vmatpush1.bf16.msra.mxu0 0
    %77 = vmatprep.subr.bf16.mxu0 0
    %78 = vmatpush1.bf16.msra.mxu0 0
    %79 = vmatprep.subr.bf16.mxu0 0
    %80 = vmatpush1.bf16.msra.mxu0 0
    %81 = vmatprep.subr.bf16.mxu0 0
    %82 = vmatpush1.bf16.msra.mxu0 0
    %83 = vmatprep.subr.bf16.mxu0 0
    %84 = vmatpush1.bf16.msra.mxu0 0
    %85 = vmatprep.subr.bf16.mxu0 0
    %86 = vmatpush1.bf16.msra.mxu0 0
    %87 = vmatprep.subr.bf16.mxu0 0
    %88 = vmatpush1.bf16.msra.mxu0 %v71
    %89 = vmatprep.subr.bf16.mxu0 0
    %90 = vmatpush2.bf16.msra.mxu0 0
    %91 = vmatprep.subr.bf16.mxu0 0
    %92 = vmatpush2.bf16.msra.mxu0 0
    %93 = vmatprep.subr.bf16.mxu0 0
    %94 = vmatpush2.bf16.msra.mxu0 0
    %95 = vmatprep.subr.bf16.mxu0 0
    %96 = vmatpush2.bf16.msra.mxu0 0
    %97 = vmatprep.subr.bf16.mxu0 0
    %98 = vmatpush2.bf16.msra.mxu0 0
    %99 = vmatprep.subr.bf16.mxu0 0
    %100 = vmatpush2.bf16.msra.mxu0 0
    %101 = vmatprep.subr.bf16.mxu0 0
    %102 = vmatpush2.bf16.msra.mxu0 0
    %103 = vmatprep.subr.bf16.mxu0 0
    %104 = vmatpush2.bf16.msra.mxu0 0
    %105 = vmatprep.mubr.bf16.mxu0 0
    %106 = vmatmul.mubr.bf16.gmra.mxu0 %v67
    %v107 = vpop.f32.mrf.mxu0
    %v108 = vadd.f32 %v63, %v107
    %v109 = vpop.f32.mrf.mxu0
    %v110 = vpop.f32.mrf.mxu0
    %v111 = vpop.f32.mrf.mxu0
    %112 = vdwg.mxu0
    %v113 = vmax.f32 %v108, 0.0
    %v114 = vpack.c.bf16 %v113, %v113
    %v115 = vld [vmem:[#allocation2] sm:$0xff]
    %v116 = vld [vmem:[#allocation2 + $0x8] sm:$0xff]
    %v117 = vld [vmem:[#allocation2 + $0x10] sm:$0xff]
    %v118 = vld [vmem:[#allocation2 + $0x18] sm:$0xff]
    %v119 = vld [vmem:[#allocation2 + $0x20] sm:$0xff]
    %v120 = vld [vmem:[#allocation2 + $0x28] sm:$0xff]
    %v121 = vld [vmem:[#allocation2 + $0x30] sm:$0xff]
    %v122 = vld [vmem:[#allocation2 + $0x38] sm:$0xff]
    %v123 = vld [vmem:[#allocation2 + $0x40] sm:$0xff]
    %v124 = vld [vmem:[#allocation2 + $0x48] sm:$0xff]
    %v125 = vld [vmem:[#allocation2 + $0x50] sm:$0xff]
    %v126 = vld [vmem:[#allocation2 + $0x58] sm:$0xff]
    %v127 = vld [vmem:[#allocation2 + $0x60] sm:$0xff]
    %v128 = vld [vmem:[#allocation2 + $0x68] sm:$0xff]
    %v129 = vld [vmem:[#allocation2 + $0x70] sm:$0xff]
    %v130 = vld [vmem:[#allocation2 + $0x78] sm:$0xff]
    %v131 = vld [vmem:[%s4] sm:$0x3]
    %v133 = vlaneseq
    %v134 = vshrl.u32 %v133, 7
    %v135 = vsub.s32 0, %v134
    %v136 = vrot.slane %v131, %v135
    %v137 = vlaneseq
    %v138 = vshrl.u32 %v137, 7
    %v139 = vsub.s32 1, %v138
    %v140 = vrot.slane %v131, %v139
    %v159 = vunpack.c.l.b16 %v115
    %v160 = vunpack.c.h.b16 %v115
    %v161 = vunpack.c.l.b16 %v116
    %v162 = vunpack.c.h.b16 %v116
    %v163 = vunpack.c.l.b16 %v117
    %v164 = vunpack.c.h.b16 %v117
    %v165 = vunpack.c.l.b16 %v118
    %v166 = vunpack.c.h.b16 %v118
    %v167 = vunpack.c.l.b16 %v119
    %v168 = vunpack.c.h.b16 %v119
    %v169 = vunpack.c.l.b16 %v120
    %v170 = vunpack.c.h.b16 %v120
    %v171 = vunpack.c.l.b16 %v121
    %v172 = vunpack.c.h.b16 %v121
    %v173 = vunpack.c.l.b16 %v122
    %v174 = vunpack.c.h.b16 %v122
    %v175 = vunpack.c.l.b16 %v123
    %v176 = vunpack.c.h.b16 %v123
    %v177 = vunpack.c.l.b16 %v124
    %v178 = vunpack.c.h.b16 %v124
    %v179 = vunpack.c.l.b16 %v125
    %v180 = vunpack.c.h.b16 %v125
    %v181 = vunpack.c.l.b16 %v126
    %v182 = vunpack.c.h.b16 %v126
    %v183 = vunpack.c.l.b16 %v127
    %v184 = vunpack.c.h.b16 %v127
    %v185 = vunpack.c.l.b16 %v128
    %v186 = vunpack.c.h.b16 %v128
    %v187 = vunpack.c.l.b16 %v129
    %v188 = vunpack.c.h.b16 %v129
    %v189 = vunpack.c.l.b16 %v130
    %v190 = vunpack.c.h.b16 %v130
    %v191 = vpack.c.b16 %v161, %v159
    %v192 = vpack.c.b16 %v162, %v160
    %v193 = vpack.c.b16 %v165, %v163
    %v194 = vpack.c.b16 %v166, %v164
    %v195 = vpack.c.b16 %v169, %v167
    %v196 = vpack.c.b16 %v170, %v168
    %v197 = vpack.c.b16 %v173, %v171
    %v198 = vpack.c.b16 %v174, %v172
    %v199 = vpack.c.b16 %v177, %v175
    %v200 = vpack.c.b16 %v178, %v176
    %v201 = vpack.c.b16 %v181, %v179
    %v202 = vpack.c.b16 %v182, %v180
    %v203 = vpack.c.b16 %v185, %v183
    %v204 = vpack.c.b16 %v186, %v184
    %v205 = vpack.c.b16 %v189, %v187
    %v206 = vpack.c.b16 %v190, %v188
    %223 = vmatprep.subr.bf16.mxu0 %v206
    %224 = vmatpush1.bf16.msra.mxu0 %v205
    %225 = vmatprep.subr.bf16.mxu0 %v204
    %226 = vmatpush1.bf16.msra.mxu0 %v203
    %227 = vmatprep.subr.bf16.mxu0 %v202
    %228 = vmatpush1.bf16.msra.mxu0 %v201
    %229 = vmatprep.subr.bf16.mxu0 %v200
    %230 = vmatpush1.bf16.msra.mxu0 %v199
    %231 = vmatprep.subr.bf16.mxu0 %v198
    %232 = vmatpush1.bf16.msra.mxu0 %v197
    %233 = vmatprep.subr.bf16.mxu0 %v196
    %234 = vmatpush1.bf16.msra.mxu0 %v195
    %235 = vmatprep.subr.bf16.mxu0 %v194
    %236 = vmatpush1.bf16.msra.mxu0 %v193
    %237 = vmatprep.subr.bf16.mxu0 %v192
    %238 = vmatpush1.bf16.msra.mxu0 %v191
    %239 = vmatprep.subr.bf16.mxu0 0
    %240 = vmatpush2.bf16.msra.mxu0 0
    %241 = vmatprep.subr.bf16.mxu0 0
    %242 = vmatpush2.bf16.msra.mxu0 0
    %243 = vmatprep.subr.bf16.mxu0 0
    %244 = vmatpush2.bf16.msra.mxu0 0
    %245 = vmatprep.subr.bf16.mxu0 0
    %246 = vmatpush2.bf16.msra.mxu0 0
    %247 = vmatprep.subr.bf16.mxu0 0
    %248 = vmatpush2.bf16.msra.mxu0 0
    %249 = vmatprep.subr.bf16.mxu0 0
    %250 = vmatpush2.bf16.msra.mxu0 0
    %251 = vmatprep.subr.bf16.mxu0 0
    %252 = vmatpush2.bf16.msra.mxu0 0
    %253 = vmatprep.subr.bf16.mxu0 0
    %254 = vmatpush2.bf16.msra.mxu0 0
    %255 = vmatprep.mubr.bf16.mxu0 0
    %256 = vmatmul.mubr.bf16.gmra.mxu0 %v114
    %v257 = vpop.f32.mrf.mxu0
    %v258 = vadd.f32 %v136, %v257
    %v259 = vpop.f32.mrf.mxu0
    %v260 = vadd.f32 %v140, %v259
    %v261 = vpop.f32.mrf.mxu0
    %v262 = vpop.f32.mrf.mxu0
    %263 = vdwg.mxu0
    %v264 = vmax.f32 %v258, 0.0
    %v265 = vmax.f32 %v260, 0.0
    %v266 = vpack.c.bf16 %v264, %v264
    %v267 = vpack.c.bf16 %v265, %v265
    %v268 = vld [vmem:[#allocation4] sm:$0xf]
    %v269 = vld [vmem:[#allocation4 + $0x4] sm:$0xf]
    %v270 = vld [vmem:[#allocation4 + $0x8] sm:$0xf]
    %v271 = vld [vmem:[#allocation4 + $0xc] sm:$0xf]
    %v272 = vld [vmem:[#allocation4 + $0x10] sm:$0xf]
    %v273 = vld [vmem:[#allocation4 + $0x14] sm:$0xf]
    %v274 = vld [vmem:[#allocation4 + $0x18] sm:$0xf]
    %v275 = vld [vmem:[#allocation4 + $0x1c] sm:$0xf]
    %v276 = vld [vmem:[#allocation4 + $0x20] sm:$0xf]
    %v277 = vld [vmem:[#allocation4 + $0x24] sm:$0xf]
    %v278 = vld [vmem:[#allocation4 + $0x28] sm:$0xf]
    %v279 = vld [vmem:[#allocation4 + $0x2c] sm:$0xf]
    %v280 = vld [vmem:[#allocation4 + $0x30] sm:$0xf]
    %v281 = vld [vmem:[#allocation4 + $0x34] sm:$0xf]
    %v282 = vld [vmem:[#allocation4 + $0x38] sm:$0xf]
    %v283 = vld [vmem:[#allocation4 + $0x3c] sm:$0xf]
    %v284 = vld [vmem:[#allocation4 + $0x40] sm:$0xf]
    %v285 = vld [vmem:[#allocation4 + $0x44] sm:$0xf]
    %v286 = vld [vmem:[#allocation4 + $0x48] sm:$0xf]
    %v287 = vld [vmem:[#allocation4 + $0x4c] sm:$0xf]
    %v288 = vld [vmem:[#allocation4 + $0x50] sm:$0xf]
    %v289 = vld [vmem:[#allocation4 + $0x54] sm:$0xf]
    %v290 = vld [vmem:[#allocation4 + $0x58] sm:$0xf]
    %v291 = vld [vmem:[#allocation4 + $0x5c] sm:$0xf]
    %v292 = vld [vmem:[#allocation4 + $0x60] sm:$0xf]
    %v293 = vld [vmem:[#allocation4 + $0x64] sm:$0xf]
    %v294 = vld [vmem:[#allocation4 + $0x68] sm:$0xf]
    %v295 = vld [vmem:[#allocation4 + $0x6c] sm:$0xf]
    %v296 = vld [vmem:[#allocation4 + $0x70] sm:$0xf]
    %v297 = vld [vmem:[#allocation4 + $0x74] sm:$0xf]
    %v298 = vld [vmem:[#allocation4 + $0x78] sm:$0xf]
    %v299 = vld [vmem:[#allocation4 + $0x7c] sm:$0xf]
    %v300 = vld [vmem:[%s6] sm:$0x1]
    %v302 = vlaneseq
    %v303 = vshrl.u32 %v302, 7
    %v304 = vsub.s32 0, %v303
    %v305 = vrot.slane %v300, %v304
    %v339 = vunpack.c.l.b16 %v268
    %v340 = vunpack.c.l.b16 %v269
    %v341 = vunpack.c.l.b16 %v270
    %v342 = vunpack.c.l.b16 %v271
    %v343 = vunpack.c.l.b16 %v272
    %v344 = vunpack.c.l.b16 %v273
    %v345 = vunpack.c.l.b16 %v274
    %v346 = vunpack.c.l.b16 %v275
    %v347 = vunpack.c.l.b16 %v276
    %v348 = vunpack.c.l.b16 %v277
    %v349 = vunpack.c.l.b16 %v278
    %v350 = vunpack.c.l.b16 %v279
    %v351 = vunpack.c.l.b16 %v280
    %v352 = vunpack.c.l.b16 %v281
    %v353 = vunpack.c.l.b16 %v282
    %v354 = vunpack.c.l.b16 %v283
    %v355 = vunpack.c.l.b16 %v284
    %v356 = vunpack.c.l.b16 %v285
    %v357 = vunpack.c.l.b16 %v286
    %v358 = vunpack.c.l.b16 %v287
    %v359 = vunpack.c.l.b16 %v288
    %v360 = vunpack.c.l.b16 %v289
    %v361 = vunpack.c.l.b16 %v290
    %v362 = vunpack.c.l.b16 %v291
    %v363 = vunpack.c.l.b16 %v292
    %v364 = vunpack.c.l.b16 %v293
    %v365 = vunpack.c.l.b16 %v294
    %v366 = vunpack.c.l.b16 %v295
    %v367 = vunpack.c.l.b16 %v296
    %v368 = vunpack.c.l.b16 %v297
    %v369 = vunpack.c.l.b16 %v298
    %v370 = vunpack.c.l.b16 %v299
    %v371 = vpack.c.b16 %v340, %v339
    %v372 = vpack.c.b16 %v342, %v341
    %v373 = vpack.c.b16 %v344, %v343
    %v374 = vpack.c.b16 %v346, %v345
    %v375 = vpack.c.b16 %v348, %v347
    %v376 = vpack.c.b16 %v350, %v349
    %v377 = vpack.c.b16 %v352, %v351
    %v378 = vpack.c.b16 %v354, %v353
    %v379 = vpack.c.b16 %v356, %v355
    %v380 = vpack.c.b16 %v358, %v357
    %v381 = vpack.c.b16 %v360, %v359
    %v382 = vpack.c.b16 %v362, %v361
    %v383 = vpack.c.b16 %v364, %v363
    %v384 = vpack.c.b16 %v366, %v365
    %v385 = vpack.c.b16 %v368, %v367
    %v386 = vpack.c.b16 %v370, %v369
    %403 = vmatprep.subr.bf16.mxu0 0
    %404 = vmatpush1.bf16.msra.mxu0 %v378
    %405 = vmatprep.subr.bf16.mxu0 0
    %406 = vmatpush1.bf16.msra.mxu0 %v377
    %407 = vmatprep.subr.bf16.mxu0 0
    %408 = vmatpush1.bf16.msra.mxu0 %v376
    %409 = vmatprep.subr.bf16.mxu0 0
    %410 = vmatpush1.bf16.msra.mxu0 %v375
    %411 = vmatprep.subr.bf16.mxu0 0
    %412 = vmatpush1.bf16.msra.mxu0 %v374
    %413 = vmatprep.subr.bf16.mxu0 0
    %414 = vmatpush1.bf16.msra.mxu0 %v373
    %415 = vmatprep.subr.bf16.mxu0 0
    %416 = vmatpush1.bf16.msra.mxu0 %v372
    %417 = vmatprep.subr.bf16.mxu0 0
    %418 = vmatpush1.bf16.msra.mxu0 %v371
    %419 = vmatprep.subr.bf16.mxu0 0
    %420 = vmatpush2.bf16.msra.mxu0 %v386
    %421 = vmatprep.subr.bf16.mxu0 0
    %422 = vmatpush2.bf16.msra.mxu0 %v385
    %423 = vmatprep.subr.bf16.mxu0 0
    %424 = vmatpush2.bf16.msra.mxu0 %v384
    %425 = vmatprep.subr.bf16.mxu0 0
    %426 = vmatpush2.bf16.msra.mxu0 %v383
    %427 = vmatprep.subr.bf16.mxu0 0
    %428 = vmatpush2.bf16.msra.mxu0 %v382
    %429 = vmatprep.subr.bf16.mxu0 0
    %430 = vmatpush2.bf16.msra.mxu0 %v381
    %431 = vmatprep.subr.bf16.mxu0 0
    %432 = vmatpush2.bf16.msra.mxu0 %v380
    %433 = vmatprep.subr.bf16.mxu0 0
    %434 = vmatpush2.bf16.msra.mxu0 %v379
    %435 = vmatprep.mubr.bf16.mxu0 %v267
    %436 = vmatmul.mubr.bf16.gmra.mxu0 %v266
    %v437 = vpop.f32.mrf.mxu0
    %v438 = vadd.f32 %v305, %v437
    %v439 = vpop.f32.mrf.mxu0
    %v440 = vpop.f32.mrf.mxu0
    %v441 = vpop.f32.mrf.mxu0
    %442 = vdwg.mxu0
    %443 = vmax.xlane.f32.xlu0 %v438
    %v444 = vpop.xlane.xlu0 %443
    %v445 = vsub.f32 %v438, %v444
    %v446 = vmul.f32 %v445, 1.442695
    %v447 = vpow.pop %v446
    %448 = vadd.xlane.f32.xlu0 %v447
    %v449 = vpop.xlane.xlu0 %448
    %v450 = vrcp.pop %v449
    %v451 = vmul.f32 %v447, %v450
    %vm452 = vcmask 15360
    %453 = vst.msk [vmem:[%s7] sm:$0xff] %vm452, %v451
    // Predicated region
    $region38: #{tpu_custom_call.1} parent=1 // pred_check
      _
    $region39: #{tpu_custom_call.1} parent=1 // pred_check_branch
      %455 = sbr.rel (0) target = $region41
    $region40: #{tpu_custom_call.1} parent=1 // pred_region
      _
    $region41: #{tpu_custom_call.1} parent=1 // pred_fallthru
      _
    // Predicated region
    $region42: #{tpu_custom_call.1} parent=1 // pred_check
      _
    $region43: #{tpu_custom_call.1} parent=1 // pred_check_branch
      %457 = sbr.rel (0) target = $region45
    $region44: #{tpu_custom_call.1} parent=1 // pred_region
      _
    $region45: #{tpu_custom_call.1} parent=1 // pred_fallthru
      _
    %458 = vsyncpa [#allocation3], 1
    %459 = vsyncpa [#allocation5], 1

</llo_original>
